<compile_context>
chip_gen: v6e
topology: v6e:2x2x1
jax: 0.10.0
libtpu: 0.0.40
codegen_flags: <defaults>
</compile_context>

<pallas_src>
import jax
import jax.numpy as jnp
from jax.experimental import pallas as pl
from jax.experimental.pallas import tpu as pltpu


def _round_up(n, m):
    return ((n + m - 1) // m) * m


def _maybe_pad(d, align=128):
    """Pad a feature dim to a lane multiple only if the overhead is small.

    Full-feature-dim blocks are always legal (block dim == array dim), so
    unpadded small dims avoid multiplying HBM traffic by up to 16x."""
    p = _round_up(d, align)
    return p if (d >= align and (p - d) * 8 <= d) else d


def _mlp_fused_kernel(x_ref, w1_ref, b1_ref, w2_ref, b2_ref, o_ref):
    """Fused: Linear -> ReLU -> Linear (normalization pre-folded into w1/b1)."""
    h = jnp.dot(x_ref[...], w1_ref[...], preferred_element_type=jnp.float32)
    h = jnp.maximum(h + b1_ref[...], 0.0)            # bias + ReLU in f32
    h = h.astype(w2_ref.dtype)                        # back to compute dtype for the MXU
    out = jnp.dot(h, w2_ref[...], preferred_element_type=jnp.float32) + b2_ref[...]
    o_ref[...] = out.astype(o_ref.dtype)


def prepare_params(params, mean=None, std=None, compute_dtype=jnp.bfloat16):
    """Fold normalization into layer 1, pad (if worthwhile) and cast -- once per model."""
    w1 = jnp.asarray(params["w1"], jnp.float32)
    b1 = jnp.asarray(params["b1"], jnp.float32).reshape(1, -1)
    w2 = jnp.asarray(params["w2"], jnp.float32)
    b2 = jnp.asarray(params["b2"], jnp.float32).reshape(1, -1)
    D_in, H = w1.shape
    D_out = w2.shape[1]

    # Fold (x - mean) / std into the first linear layer (exact algebraic rewrite;
    # rounding differs slightly from an unfused reference).
    if mean is not None and std is not None:
        mean = jnp.asarray(mean, jnp.float32).reshape(1, D_in)
        std = jnp.asarray(std, jnp.float32).reshape(1, D_in)
        inv_std = 1.0 / std
        b1 = b1 - (mean * inv_std) @ w1              # uses the *original* w1
        w1 = w1 * inv_std.reshape(D_in, 1)           # scale rows of w1 by 1/std

    D_in_p, H_p, D_out_p = _maybe_pad(D_in), _maybe_pad(H), _maybe_pad(D_out)
    w1p = jnp.zeros((D_in_p, H_p), jnp.float32).at[:D_in, :H].set(w1).astype(compute_dtype)
    w2p = jnp.zeros((H_p, D_out_p), jnp.float32).at[:H, :D_out].set(w2).astype(compute_dtype)
    b1p = jnp.zeros((1, H_p), jnp.float32).at[:, :H].set(b1)
    b2p = jnp.zeros((1, D_out_p), jnp.float32).at[:, :D_out].set(b2)
    return {
        "w1": w1p, "b1": b1p, "w2": w2p, "b2": b2p,
        "d_in": D_in, "d_out": D_out,
        "d_in_p": D_in_p, "h_p": H_p, "d_out_p": D_out_p,
        "compute_dtype": compute_dtype,
    }


def _vmem_capacity_bytes():
    try:
        return int(pltpu.get_tpu_info().vmem_capacity_bytes)
    except Exception:
        return 64 << 20   # v7x per-TensorCore capacity; conservative for v5e/v6e


# Flipped to False (and cached) if pl.Buffered(1) is rejected by this runtime.
_SINGLE_BUFFER_WEIGHTS_OK = [True]


def mlp_base_wrapper_forward(x, prepared, block_b=512):
    """JAX forward mirroring MLPBaseWrapper.forward for a 2-layer MLP.

    x: (B, D_in) ; prepared: output of prepare_params()."""
    B = x.shape[0]
    D_in, D_out = prepared["d_in"], prepared["d_out"]
    D_in_p, H_p, D_out_p = prepared["d_in_p"], prepared["h_p"], prepared["d_out_p"]
    cdt = prepared["compute_dtype"]
    w1, b1, w2, b2 = prepared["w1"], prepared["b1"], prepared["w2"], prepared["b2"]

    x = jnp.asarray(x, cdt)
    if D_in_p != D_in:
        x = jnp.pad(x, ((0, 0), (0, D_in_p - D_in)))

    csz = jnp.dtype(cdt).itemsize
    cap = _vmem_capacity_bytes()
    budget = int(cap * 0.6)

    def vmem_bytes(tb, weight_bufs):
        weights = weight_bufs * (D_in_p * H_p + H_p * D_out_p) * csz
        biases = weight_bufs * (H_p + D_out_p) * 4
        io = 2 * tb * (D_in_p * csz + D_out_p * 4)       # double-buffered x / out tiles
        hidden = tb * H_p * (4 + csz)                     # f32 acc + compute-dtype copy
        return weights + biases + io + hidden

    # Batch tile: <= block_b, multiple of 8, >= 2 grid steps when the batch allows
    # (keeps both v7x TensorCores busy), and fitting the VMEM budget.
    if B <= 8:
        TB = B                                            # block == full batch dim (legal)
    else:
        TB = min(_round_up(block_b, 8), _round_up(B, 8))
        TB = min(TB, _round_up(pl.cdiv(B, 2), 8))
        while TB > 8 and vmem_bytes(TB, 1) > budget:
            TB = max(8, _round_up(TB // 2, 8))
    # TODO(synk): fall back to an H/D_out-tiled grid (VMEM f32 accumulator +
    # pl.when init/finalize) when the resident weights alone exceed the VMEM budget.

    grid = (pl.cdiv(B, TB),)
    cost = pl.CostEstimate(
        flops=2 * B * (D_in_p * H_p + H_p * D_out_p),
        transcendentals=0,
        bytes_accessed=(B * D_in_p * csz + B * D_out_p * 4
                        + (D_in_p * H_p + H_p * D_out_p) * csz
                        + (H_p + D_out_p) * 4),
    )

    def build(single_buffer_weights):
        wkw = {"pipeline_mode": pl.Buffered(1)} if single_buffer_weights else {}
        weight_bufs = 1 if single_buffer_weights else 2
        est = vmem_bytes(TB, weight_bufs) + (2 << 20)
        vmem_limit = int(max(16 << 20, min(est + (4 << 20), cap - (4 << 20))))
        return pl.pallas_call(
            _mlp_fused_kernel,
            out_shape=jax.ShapeDtypeStruct((B, D_out_p), jnp.float32),
            grid=grid,
            in_specs=[
                pl.BlockSpec((TB, D_in_p), lambda i: (i, 0)),             # x: batch-tiled
                pl.BlockSpec((D_in_p, H_p), lambda i: (0, 0), **wkw),     # w1: resident
                pl.BlockSpec((1, H_p), lambda i: (0, 0), **wkw),          # b1: resident
                pl.BlockSpec((H_p, D_out_p), lambda i: (0, 0), **wkw),    # w2: resident
                pl.BlockSpec((1, D_out_p), lambda i: (0, 0), **wkw),      # b2: resident
            ],
            out_specs=pl.BlockSpec((TB, D_out_p), lambda i: (i, 0)),
            compiler_params=pltpu.CompilerParams(
                dimension_semantics=("parallel",),
                vmem_limit_bytes=vmem_limit),
            cost_estimate=cost,
        )

    if _SINGLE_BUFFER_WEIGHTS_OK[0]:
        try:
            out = build(True)(x, w1, b1, w2, b2)
        except Exception:
            _SINGLE_BUFFER_WEIGHTS_OK[0] = False
            out = build(False)(x, w1, b1, w2, b2)
    else:
        out = build(False)(x, w1, b1, w2, b2)

    return out if D_out_p == D_out else out[:, :D_out]


def init_params(key, d_in, hidden, d_out):
    """Deterministic synthetic parameter init (no checkpoint loading)."""
    k1, k2, k3, k4 = jax.random.split(key, 4)
    s1 = 1.0 / jnp.sqrt(d_in)
    s2 = 1.0 / jnp.sqrt(hidden)
    return {
        "w1": jax.random.uniform(k1, (d_in, hidden), jnp.float32, -s1, s1),
        "b1": jax.random.uniform(k2, (1, hidden), jnp.float32, -s1, s1),
        "w2": jax.random.uniform(k3, (hidden, d_out), jnp.float32, -s2, s2),
        "b2": jax.random.uniform(k4, (1, d_out), jnp.float32, -s2, s2),
    }


def _reference(x, params, mean=None, std=None):
    xn = x if (mean is None or std is None) else (x - mean) / std
    h = jnp.maximum(xn @ params["w1"] + params["b1"], 0.0)
    return h @ params["w2"] + params["b2"]


if __name__ == "__main__":
    key = jax.random.PRNGKey(0)
    kx, kp, kb = jax.random.split(key, 3)

    # Small shapes consistent with the module (feature vector in, MLP, vector out).
    B, D_in, H, D_out = 8, 16, 32, 8
    x = jax.random.normal(kx, (B, D_in), jnp.float32)
    params = init_params(kp, D_in, H, D_out)

    # Normalization params as MLPBaseWrapper would hold them (from an observation space).
    low = -2.0 * jnp.ones((1, D_in), jnp.float32)
    high = 2.0 * jnp.ones((1, D_in), jnp.float32)
    mean = (high + low) / 2.0
    std = (high - low) / 2.0

    # 1) Normalized path, bf16 compute (default).  prepare_params is hoisted & reused.
    prep = prepare_params(params, mean=mean, std=std)
    out = jax.block_until_ready(mlp_base_wrapper_forward(x, prep))
    ref = _reference(x, params, mean, std)
    assert out.shape == (B, D_out)
    assert jnp.allclose(out, ref, atol=3e-2, rtol=3e-2)

    # 2) No-normalization path (mean/std are None).
    prep_nonorm = prepare_params(params)
    out2 = jax.block_until_ready(mlp_base_wrapper_forward(x, prep_nonorm))
    ref2 = _reference(x, params)
    assert jnp.allclose(out2, ref2, atol=3e-2, rtol=3e-2)

    # 3) Larger, non-tile-aligned batch: multi-step grid + trailing partial block
    #    (no host-side batch padding), reusing the already-prepared params.
    x_big = jax.random.normal(kb, (200, D_in), jnp.float32)
    out3 = jax.block_until_ready(mlp_base_wrapper_forward(x_big, prep, block_b=64))
    ref3 = _reference(x_big, params, mean, std)
    assert out3.shape == (200, D_out)
    assert jnp.allclose(out3, ref3, atol=3e-2, rtol=3e-2)

    # 4) Bit-accuracy path in f32.
    prep_f32 = prepare_params(params, mean=mean, std=std, compute_dtype=jnp.float32)
    out4 = jax.block_until_ready(mlp_base_wrapper_forward(x, prep_f32))
    assert jnp.allclose(out4, ref, atol=1e-5, rtol=1e-5)

    print("KERNEL_OK")
</pallas_src>

<mosaic_0001>
module attributes {stable_mosaic.version = 11 : i64} {
  func.func @_mlp_fused_kernel(%arg0: i32, %arg1: memref<8x16xbf16, #tpu.memory_space<vmem>>, %arg2: memref<16x32xbf16, #tpu.memory_space<vmem>>, %arg3: memref<1x32xf32, #tpu.memory_space<vmem>>, %arg4: memref<32x8xbf16, #tpu.memory_space<vmem>>, %arg5: memref<1x8xf32, #tpu.memory_space<vmem>>, %arg6: memref<8x8xf32, #tpu.memory_space<vmem>>) attributes {dimension_semantics = [#tpu.dimension_semantics<parallel>], iteration_bounds = array<i64: 1>, scalar_prefetch = 0 : i64, scratch_operands = 0 : i64, tpu.core_type = #tpu.core_type<tc>, window_params = [{transform_indices = @transform_0, window_bounds = array<i64: 8, 16>}, {pipeline_mode = #tpu.pipeline_mode<synchronous>, transform_indices = @transform_1, window_bounds = array<i64: 16, 32>}, {pipeline_mode = #tpu.pipeline_mode<synchronous>, transform_indices = @transform_2, window_bounds = array<i64: 1, 32>}, {pipeline_mode = #tpu.pipeline_mode<synchronous>, transform_indices = @transform_3, window_bounds = array<i64: 32, 8>}, {pipeline_mode = #tpu.pipeline_mode<synchronous>, transform_indices = @transform_4, window_bounds = array<i64: 1, 8>}, {transform_indices = @transform_5, window_bounds = array<i64: 8, 8>}]} {
    %c0 = arith.constant 0 : index
    %c0_0 = arith.constant 0 : index
    %0 = vector.load %arg1[%c0, %c0_0] : memref<8x16xbf16, #tpu.memory_space<vmem>>, vector<8x16xbf16>
    %c0_1 = arith.constant 0 : index
    %c0_2 = arith.constant 0 : index
    %1 = vector.load %arg2[%c0_1, %c0_2] : memref<16x32xbf16, #tpu.memory_space<vmem>>, vector<16x32xbf16>
    %cst = arith.constant dense<0.000000e+00> : vector<8x32xf32>
    %2 = tpu.matmul %0, %1, %cst {dimension_numbers = #tpu.dot_dimension_numbers<[1], [0], [0], [1], [0, 0, 1, 1], [], []>} : vector<8x16xbf16>, vector<16x32xbf16>, vector<8x32xf32> -> vector<8x32xf32>
    %c0_3 = arith.constant 0 : index
    %c0_4 = arith.constant 0 : index
    %3 = vector.load %arg3[%c0_3, %c0_4] : memref<1x32xf32, #tpu.memory_space<vmem>>, vector<1x32xf32>
    %4 = vector.broadcast %3 : vector<1x32xf32> to vector<8x32xf32>
    %5 = arith.addf %2, %4 : vector<8x32xf32>
    %cst_5 = arith.constant 0.000000e+00 : f32
    %6 = vector.broadcast %cst_5 : f32 to vector<8x32xf32>
    %7 = arith.maximumf %5, %6 : vector<8x32xf32>
    %8 = arith.truncf %7 : vector<8x32xf32> to vector<8x32xbf16>
    %c0_6 = arith.constant 0 : index
    %c0_7 = arith.constant 0 : index
    %9 = vector.load %arg4[%c0_6, %c0_7] : memref<32x8xbf16, #tpu.memory_space<vmem>>, vector<32x8xbf16>
    %cst_8 = arith.constant dense<0.000000e+00> : vector<8x8xf32>
    %10 = tpu.matmul %8, %9, %cst_8 {dimension_numbers = #tpu.dot_dimension_numbers<[1], [0], [0], [1], [0, 0, 1, 1], [], []>} : vector<8x32xbf16>, vector<32x8xbf16>, vector<8x8xf32> -> vector<8x8xf32>
    %c0_9 = arith.constant 0 : index
    %c0_10 = arith.constant 0 : index
    %11 = vector.load %arg5[%c0_9, %c0_10] : memref<1x8xf32, #tpu.memory_space<vmem>>, vector<1x8xf32>
    %12 = vector.broadcast %11 : vector<1x8xf32> to vector<8x8xf32>
    %13 = arith.addf %10, %12 : vector<8x8xf32>
    %c0_11 = arith.constant 0 : index
    %c0_12 = arith.constant 0 : index
    %14 = vector.load %arg6[%c0_11, %c0_12] : memref<8x8xf32, #tpu.memory_space<vmem>>, vector<8x8xf32>
    tpu.vector_store %arg6[%c0_11, %c0_12], %13 {strides = array<i32>} : memref<8x8xf32, #tpu.memory_space<vmem>>, vector<8x8xf32>,
    return
  }
  func.func @transform_0(%arg0: i32) -> (i32, i32) {
    %c0_i32 = arith.constant 0 : i32
    %c0_i32_0 = arith.constant 0 : i32
    return %arg0, %c0_i32 : i32, i32
  }
  func.func @transform_1(%arg0: i32) -> (i32, i32) {
    %c0_i32 = arith.constant 0 : i32
    %c0_i32_0 = arith.constant 0 : i32
    %c0_i32_1 = arith.constant 0 : i32
    return %c0_i32, %c0_i32_0 : i32, i32
  }
  func.func @transform_2(%arg0: i32) -> (i32, i32) {
    %c0_i32 = arith.constant 0 : i32
    %c0_i32_0 = arith.constant 0 : i32
    %c0_i32_1 = arith.constant 0 : i32
    return %c0_i32, %c0_i32_0 : i32, i32
  }
  func.func @transform_3(%arg0: i32) -> (i32, i32) {
    %c0_i32 = arith.constant 0 : i32
    %c0_i32_0 = arith.constant 0 : i32
    %c0_i32_1 = arith.constant 0 : i32
    return %c0_i32, %c0_i32_0 : i32, i32
  }
  func.func @transform_4(%arg0: i32) -> (i32, i32) {
    %c0_i32 = arith.constant 0 : i32
    %c0_i32_0 = arith.constant 0 : i32
    %c0_i32_1 = arith.constant 0 : i32
    return %c0_i32, %c0_i32_0 : i32, i32
  }
  func.func @transform_5(%arg0: i32) -> (i32, i32) {
    %c0_i32 = arith.constant 0 : i32
    %c0_i32_0 = arith.constant 0 : i32
    return %arg0, %c0_i32 : i32, i32
  }
}

module attributes {stable_mosaic.version = 11 : i64} {
  func.func @_mlp_fused_kernel(%arg0: i32, %arg1: memref<8x16xbf16, #tpu.memory_space<vmem>>, %arg2: memref<16x32xbf16, #tpu.memory_space<vmem>>, %arg3: memref<1x32xf32, #tpu.memory_space<vmem>>, %arg4: memref<32x8xbf16, #tpu.memory_space<vmem>>, %arg5: memref<1x8xf32, #tpu.memory_space<vmem>>, %arg6: memref<8x8xf32, #tpu.memory_space<vmem>>) attributes {dimension_semantics = [#tpu.dimension_semantics<parallel>], iteration_bounds = array<i64: 1>, scalar_prefetch = 0 : i64, scratch_operands = 0 : i64, tpu.core_type = #tpu.core_type<tc>, window_params = [{transform_indices = @transform_0, window_bounds = array<i64: 8, 16>}, {pipeline_mode = #tpu.pipeline_mode<synchronous>, transform_indices = @transform_1, window_bounds = array<i64: 16, 32>}, {pipeline_mode = #tpu.pipeline_mode<synchronous>, transform_indices = @transform_2, window_bounds = array<i64: 1, 32>}, {pipeline_mode = #tpu.pipeline_mode<synchronous>, transform_indices = @transform_3, window_bounds = array<i64: 32, 8>}, {pipeline_mode = #tpu.pipeline_mode<synchronous>, transform_indices = @transform_4, window_bounds = array<i64: 1, 8>}, {transform_indices = @transform_5, window_bounds = array<i64: 8, 8>}]} {
    %c0 = arith.constant 0 : index
    %c0_0 = arith.constant 0 : index
    %0 = vector.load %arg1[%c0, %c0_0] : memref<8x16xbf16, #tpu.memory_space<vmem>>, vector<8x16xbf16>
    %c0_1 = arith.constant 0 : index
    %c0_2 = arith.constant 0 : index
    %1 = vector.load %arg2[%c0_1, %c0_2] : memref<16x32xbf16, #tpu.memory_space<vmem>>, vector<16x32xbf16>
    %cst = arith.constant dense<0.000000e+00> : vector<8x32xf32>
    %2 = tpu.matmul %0, %1, %cst {dimension_numbers = #tpu.dot_dimension_numbers<[1], [0], [0], [1], [0, 0, 1, 1], [], []>} : vector<8x16xbf16>, vector<16x32xbf16>, vector<8x32xf32> -> vector<8x32xf32>
    %c0_3 = arith.constant 0 : index
    %c0_4 = arith.constant 0 : index
    %3 = vector.load %arg3[%c0_3, %c0_4] : memref<1x32xf32, #tpu.memory_space<vmem>>, vector<1x32xf32>
    %4 = vector.broadcast %3 : vector<1x32xf32> to vector<8x32xf32>
    %5 = arith.addf %2, %4 : vector<8x32xf32>
    %cst_5 = arith.constant 0.000000e+00 : f32
    %6 = vector.broadcast %cst_5 : f32 to vector<8x32xf32>
    %7 = arith.maximumf %5, %6 : vector<8x32xf32>
    %8 = arith.truncf %7 : vector<8x32xf32> to vector<8x32xbf16>
    %c0_6 = arith.constant 0 : index
    %c0_7 = arith.constant 0 : index
    %9 = vector.load %arg4[%c0_6, %c0_7] : memref<32x8xbf16, #tpu.memory_space<vmem>>, vector<32x8xbf16>
    %cst_8 = arith.constant dense<0.000000e+00> : vector<8x8xf32>
    %10 = tpu.matmul %8, %9, %cst_8 {dimension_numbers = #tpu.dot_dimension_numbers<[1], [0], [0], [1], [0, 0, 1, 1], [], []>} : vector<8x32xbf16>, vector<32x8xbf16>, vector<8x8xf32> -> vector<8x8xf32>
    %c0_9 = arith.constant 0 : index
    %c0_10 = arith.constant 0 : index
    %11 = vector.load %arg5[%c0_9, %c0_10] : memref<1x8xf32, #tpu.memory_space<vmem>>, vector<1x8xf32>
    %12 = vector.broadcast %11 : vector<1x8xf32> to vector<8x8xf32>
    %13 = arith.addf %10, %12 : vector<8x8xf32>
    %c0_11 = arith.constant 0 : index
    %c0_12 = arith.constant 0 : index
    %14 = vector.load %arg6[%c0_11, %c0_12] : memref<8x8xf32, #tpu.memory_space<vmem>>, vector<8x8xf32>
    tpu.vector_store %arg6[%c0_11, %c0_12], %13 {strides = array<i32>} : memref<8x8xf32, #tpu.memory_space<vmem>>, vector<8x8xf32>,
    return
  }
  func.func @transform_0(%arg0: i32) -> (i32, i32) {
    %c0_i32 = arith.constant 0 : i32
    %c0_i32_0 = arith.constant 0 : i32
    return %arg0, %c0_i32 : i32, i32
  }
  func.func @transform_1(%arg0: i32) -> (i32, i32) {
    %c0_i32 = arith.constant 0 : i32
    %c0_i32_0 = arith.constant 0 : i32
    %c0_i32_1 = arith.constant 0 : i32
    return %c0_i32, %c0_i32_0 : i32, i32
  }
  func.func @transform_2(%arg0: i32) -> (i32, i32) {
    %c0_i32 = arith.constant 0 : i32
    %c0_i32_0 = arith.constant 0 : i32
    %c0_i32_1 = arith.constant 0 : i32
    return %c0_i32, %c0_i32_0 : i32, i32
  }
  func.func @transform_3(%arg0: i32) -> (i32, i32) {
    %c0_i32 = arith.constant 0 : i32
    %c0_i32_0 = arith.constant 0 : i32
    %c0_i32_1 = arith.constant 0 : i32
    return %c0_i32, %c0_i32_0 : i32, i32
  }
  func.func @transform_4(%arg0: i32) -> (i32, i32) {
    %c0_i32 = arith.constant 0 : i32
    %c0_i32_0 = arith.constant 0 : i32
    %c0_i32_1 = arith.constant 0 : i32
    return %c0_i32, %c0_i32_0 : i32, i32
  }
  func.func @transform_5(%arg0: i32) -> (i32, i32) {
    %c0_i32 = arith.constant 0 : i32
    %c0_i32_0 = arith.constant 0 : i32
    return %arg0, %c0_i32 : i32, i32
  }
}

</mosaic_0001>

<llo_original>
// kernel: tpu_custom_call.1
$region0: #{tpu_custom_call.1}
  #allocation0 [shape = 'u32[]', space=smem, size = 0x4, offset = 0x4, fixed_abs, tag = 'smem constant byte address 0x4 - core index']
  #allocation1 [shape = 'u32[144,128]{1,0:T(1,128)}', space=vmem, size = 0x12000, scoped, tag = 'internal scratch']
  %s0 = inlined_call_operand.vmem [shape: bf16[8,16], index: 0, kind: input, shape index: {}]
  %s1 = inlined_call_operand.vmem [shape: bf16[16,32], index: 1, kind: input, shape index: {}]
  %s2 = inlined_call_operand.vmem [shape: f32[1,32], index: 2, kind: input, shape index: {}]
  %s3 = inlined_call_operand.vmem [shape: bf16[32,8], index: 3, kind: input, shape index: {}]
  %s4 = inlined_call_operand.vmem [shape: f32[1,8], index: 4, kind: input, shape index: {}]
  %s5 = inlined_call_operand.hbm [shape: f32[8,8], index: 5, kind: output, shape index: {}]
  %s6 = sld [smem:[#allocation0]]
  $region30: #{tpu_custom_call.1} parent=0
    _
  %s8 = ssub.s32 1, %s6
  %s9 = scalar_select 0, %s8, %s6
  $region1: #{tpu_custom_call.1} parent=0
    #allocation2 [shape = 'u8[4096]{0}', space=vmem, size = 0x1000, scoped, tag = 'output window, operand 0, single buffered']
    #allocation3 [shape = 's32[1]{0}', space=sflag, size = 0x4, scoped, tag = 'scoped memory for tpu_custom_call.1']
    %10 = vsyncpa [#allocation3], 0
    // Predicated region
    $region2: #{tpu_custom_call.1} parent=1 // pred_check
      _
    $region3: #{tpu_custom_call.1} parent=1 // pred_check_branch
      %12 = sbr.rel (0) target = $region5
    $region4: #{tpu_custom_call.1} parent=1 // pred_region
      _
    $region5: #{tpu_custom_call.1} parent=1 // pred_fallthru
      _
    // Predicated region
    $region6: #{tpu_custom_call.1} parent=1 // pred_check
      _
    $region7: #{tpu_custom_call.1} parent=1 // pred_check_branch
      %14 = sbr.rel (0) target = $region9
    $region8: #{tpu_custom_call.1} parent=1 // pred_region
      _
    $region9: #{tpu_custom_call.1} parent=1 // pred_fallthru
      _
    // Predicated region
    $region10: #{tpu_custom_call.1} parent=1 // pred_check
      _
    $region11: #{tpu_custom_call.1} parent=1 // pred_check_branch
      %16 = sbr.rel (0) target = $region13
    $region12: #{tpu_custom_call.1} parent=1 // pred_region
      _
    $region13: #{tpu_custom_call.1} parent=1 // pred_fallthru
      _
    // Predicated region
    $region14: #{tpu_custom_call.1} parent=1 // pred_check
      _
    $region15: #{tpu_custom_call.1} parent=1 // pred_check_branch
      %18 = sbr.rel (0) target = $region17
    $region16: #{tpu_custom_call.1} parent=1 // pred_region
      _
    $region17: #{tpu_custom_call.1} parent=1 // pred_fallthru
      _
    // Predicated region
    $region18: #{tpu_custom_call.1} parent=1 // pred_check
      _
    $region19: #{tpu_custom_call.1} parent=1 // pred_check_branch
      %20 = sbr.rel (0) target = $region21
    $region20: #{tpu_custom_call.1} parent=1 // pred_region
      _
    $region21: #{tpu_custom_call.1} parent=1 // pred_fallthru
      _
    %v22 = vld [vmem:[%s0] sm:$0xf]
    %v23 = vld [vmem:[%s1] sm:$0xf]
    %v24 = vld [vmem:[%s1 + $0x4] sm:$0xf]
    %v25 = vld [vmem:[%s2] sm:$0x1]
    %v27 = vlaneseq
    %v28 = vshrl.u32 %v27, 7
    %v29 = vsub.s32 0, %v28
    %v30 = vrot.slane %v25, %v29
    %v34 = vunpack.c.l.b16 %v23
    %v35 = vunpack.c.l.b16 %v24
    %v36 = vpack.c.b16 %v35, %v34
    %vm38 = vcmask 130048
    %v40 = vsel %vm38, %v22, 0
    %42 = vmatprep.subr.bf16.mxu0 0
    %43 = vmatpush1.bf16.msra.mxu0 0
    %44 = vmatprep.subr.bf16.mxu0 0
    %45 = vmatpush1.bf16.msra.mxu0 0
    %46 = vmatprep.subr.bf16.mxu0 0
    %47 = vmatpush1.bf16.msra.mxu0 0
    %48 = vmatprep.subr.bf16.mxu0 0
    %49 = vmatpush1.bf16.msra.mxu0 0
    %50 = vmatprep.subr.bf16.mxu0 0
    %51 = vmatpush1.bf16.msra.mxu0 0
    %52 = vmatprep.subr.bf16.mxu0 0
    %53 = vmatpush1.bf16.msra.mxu0 0
    %54 = vmatprep.subr.bf16.mxu0 0
    %55 = vmatpush1.bf16.msra.mxu0 0
    %56 = vmatprep.subr.bf16.mxu0 0
    %57 = vmatpush1.bf16.msra.mxu0 %v36
    %58 = vmatprep.subr.bf16.mxu0 0
    %59 = vmatpush2.bf16.msra.mxu0 0
    %60 = vmatprep.subr.bf16.mxu0 0
    %61 = vmatpush2.bf16.msra.mxu0 0
    %62 = vmatprep.subr.bf16.mxu0 0
    %63 = vmatpush2.bf16.msra.mxu0 0
    %64 = vmatprep.subr.bf16.mxu0 0
    %65 = vmatpush2.bf16.msra.mxu0 0
    %66 = vmatprep.subr.bf16.mxu0 0
    %67 = vmatpush2.bf16.msra.mxu0 0
    %68 = vmatprep.subr.bf16.mxu0 0
    %69 = vmatpush2.bf16.msra.mxu0 0
    %70 = vmatprep.subr.bf16.mxu0 0
    %71 = vmatpush2.bf16.msra.mxu0 0
    %72 = vmatprep.subr.bf16.mxu0 0
    %73 = vmatpush2.bf16.msra.mxu0 0
    %74 = vmatprep.mubr.bf16.mxu0 0
    %75 = vmatmul.mubr.bf16.gmra.mxu0 %v40
    %v76 = vpop.f32.mrf.mxu0
    %v77 = vadd.f32 %v30, %v76
    %v78 = vpop.f32.mrf.mxu0
    %v79 = vpop.f32.mrf.mxu0
    %v80 = vpop.f32.mrf.mxu0
    %81 = vdwg.mxu0
    %v82 = vmax.f32 %v77, 0.0
    %v83 = vpack.c.bf16 %v82, %v82
    %v84 = vld [vmem:[%s3] sm:$0xf]
    %v85 = vld [vmem:[%s3 + $0x4] sm:$0xf]
    %v86 = vld [vmem:[%s3 + $0x8] sm:$0xf]
    %v87 = vld [vmem:[%s3 + $0xc] sm:$0xf]
    %v88 = vld [vmem:[%s4] sm:$0x1]
    %v90 = vlaneseq
    %v91 = vshrl.u32 %v90, 7
    %v92 = vsub.s32 0, %v91
    %v93 = vrot.slane %v88, %v92
    %v99 = vunpack.c.l.b16 %v84
    %v100 = vunpack.c.l.b16 %v85
    %v101 = vunpack.c.l.b16 %v86
    %v102 = vunpack.c.l.b16 %v87
    %v103 = vpack.c.b16 %v100, %v99
    %v104 = vpack.c.b16 %v102, %v101
    %vm107 = vcmask 261120
    %v109 = vsel %vm107, %v83, 0
    %111 = vmatprep.subr.bf16.mxu0 0
    %112 = vmatpush1.bf16.msra.mxu0 0
    %113 = vmatprep.subr.bf16.mxu0 0
    %114 = vmatpush1.bf16.msra.mxu0 0
    %115 = vmatprep.subr.bf16.mxu0 0
    %116 = vmatpush1.bf16.msra.mxu0 0
    %117 = vmatprep.subr.bf16.mxu0 0
    %118 = vmatpush1.bf16.msra.mxu0 0
    %119 = vmatprep.subr.bf16.mxu0 0
    %120 = vmatpush1.bf16.msra.mxu0 0
    %121 = vmatprep.subr.bf16.mxu0 0
    %122 = vmatpush1.bf16.msra.mxu0 0
    %123 = vmatprep.subr.bf16.mxu0 0
    %124 = vmatpush1.bf16.msra.mxu0 %v104
    %125 = vmatprep.subr.bf16.mxu0 0
    %126 = vmatpush1.bf16.msra.mxu0 %v103
    %127 = vmatprep.subr.bf16.mxu0 0
    %128 = vmatpush2.bf16.msra.mxu0 0
    %129 = vmatprep.subr.bf16.mxu0 0
    %130 = vmatpush2.bf16.msra.mxu0 0
    %131 = vmatprep.subr.bf16.mxu0 0
    %132 = vmatpush2.bf16.msra.mxu0 0
    %133 = vmatprep.subr.bf16.mxu0 0
    %134 = vmatpush2.bf16.msra.mxu0 0
    %135 = vmatprep.subr.bf16.mxu0 0
    %136 = vmatpush2.bf16.msra.mxu0 0
    %137 = vmatprep.subr.bf16.mxu0 0
    %138 = vmatpush2.bf16.msra.mxu0 0
    %139 = vmatprep.subr.bf16.mxu0 0
    %140 = vmatpush2.bf16.msra.mxu0 0
    %141 = vmatprep.subr.bf16.mxu0 0
    %142 = vmatpush2.bf16.msra.mxu0 0
    %143 = vmatprep.mubr.bf16.mxu0 0
    %144 = vmatmul.mubr.bf16.gmra.mxu0 %v109
    %v145 = vpop.f32.mrf.mxu0
    %v146 = vadd.f32 %v93, %v145
    %v147 = vpop.f32.mrf.mxu0
    %v148 = vpop.f32.mrf.mxu0
    %v149 = vpop.f32.mrf.mxu0
    %150 = vdwg.mxu0
    %vm151 = vcmask 64512
    %152 = vst.msk [vmem:[#allocation2] sm:$0xff] %vm151, %v146
    // Predicated region
    $region22: #{tpu_custom_call.1} parent=1 // pred_check
      _
    $region23: #{tpu_custom_call.1} parent=1 // pred_check_branch
      %154 = sbr.rel (0) target = $region25
    $region24: #{tpu_custom_call.1} parent=1 // pred_region
      %s156 = ssub.s32 128, 128
      %157 = vsyncadd [#allocation3], %s156
      %s159 = sshll.u32 [#allocation2], 4
      %s160 = int_to_ptr.vmem [resolvable:$true] %s159
      %162 = dma.vmem_to_hbm [thread:$0]  %s160, 128, %s5, [#allocation3]
    $region25: #{tpu_custom_call.1} parent=1 // pred_fallthru
      _
    // Predicated region
    $region26: #{tpu_custom_call.1} parent=1 // pred_check
      _
    $region27: #{tpu_custom_call.1} parent=1 // pred_check_branch
      %164 = sbr.rel (0) target = $region29
    $region28: #{tpu_custom_call.1} parent=1 // pred_region
      %165 = dma.done [#allocation3], 128
    $region29: #{tpu_custom_call.1} parent=1 // pred_fallthru
      _
    %166 = vsyncpa [#allocation3], 1

// kernel: tpu_custom_call.1
$region0: #{tpu_custom_call.1}
  #allocation0 [shape = 'u32[]', space=smem, size = 0x4, offset = 0x4, fixed_abs, tag = 'smem constant byte address 0x4 - core index']
  #allocation1 [shape = 'u32[144,128]{1,0:T(1,128)}', space=vmem, size = 0x12000, scoped, tag = 'internal scratch']
  %s0 = inlined_call_operand.vmem [shape: bf16[8,16], index: 0, kind: input, shape index: {}]
  %s1 = inlined_call_operand.vmem [shape: bf16[16,32], index: 1, kind: input, shape index: {}]
  %s2 = inlined_call_operand.vmem [shape: f32[1,32], index: 2, kind: input, shape index: {}]
  %s3 = inlined_call_operand.vmem [shape: bf16[32,8], index: 3, kind: input, shape index: {}]
  %s4 = inlined_call_operand.vmem [shape: f32[1,8], index: 4, kind: input, shape index: {}]
  %s5 = inlined_call_operand.hbm [shape: f32[8,8], index: 5, kind: output, shape index: {}]
  %s6 = sld [smem:[#allocation0]]
  $region30: #{tpu_custom_call.1} parent=0
    _
  %s8 = ssub.s32 1, %s6
  %s9 = scalar_select 0, %s8, %s6
  $region1: #{tpu_custom_call.1} parent=0
    #allocation2 [shape = 'u8[4096]{0}', space=vmem, size = 0x1000, scoped, tag = 'output window, operand 0, single buffered']
    #allocation3 [shape = 's32[1]{0}', space=sflag, size = 0x4, scoped, tag = 'scoped memory for tpu_custom_call.1']
    %10 = vsyncpa [#allocation3], 0
    // Predicated region
    $region2: #{tpu_custom_call.1} parent=1 // pred_check
      _
    $region3: #{tpu_custom_call.1} parent=1 // pred_check_branch
      %12 = sbr.rel (0) target = $region5
    $region4: #{tpu_custom_call.1} parent=1 // pred_region
      _
    $region5: #{tpu_custom_call.1} parent=1 // pred_fallthru
      _
    // Predicated region
    $region6: #{tpu_custom_call.1} parent=1 // pred_check
      _
    $region7: #{tpu_custom_call.1} parent=1 // pred_check_branch
      %14 = sbr.rel (0) target = $region9
    $region8: #{tpu_custom_call.1} parent=1 // pred_region
      _
    $region9: #{tpu_custom_call.1} parent=1 // pred_fallthru
      _
    // Predicated region
    $region10: #{tpu_custom_call.1} parent=1 // pred_check
      _
    $region11: #{tpu_custom_call.1} parent=1 // pred_check_branch
      %16 = sbr.rel (0) target = $region13
    $region12: #{tpu_custom_call.1} parent=1 // pred_region
      _
    $region13: #{tpu_custom_call.1} parent=1 // pred_fallthru
      _
    // Predicated region
    $region14: #{tpu_custom_call.1} parent=1 // pred_check
      _
    $region15: #{tpu_custom_call.1} parent=1 // pred_check_branch
      %18 = sbr.rel (0) target = $region17
    $region16: #{tpu_custom_call.1} parent=1 // pred_region
      _
    $region17: #{tpu_custom_call.1} parent=1 // pred_fallthru
      _
    // Predicated region
    $region18: #{tpu_custom_call.1} parent=1 // pred_check
      _
    $region19: #{tpu_custom_call.1} parent=1 // pred_check_branch
      %20 = sbr.rel (0) target = $region21
    $region20: #{tpu_custom_call.1} parent=1 // pred_region
      _
    $region21: #{tpu_custom_call.1} parent=1 // pred_fallthru
      _
    %v22 = vld [vmem:[%s0] sm:$0xf]
    %v23 = vld [vmem:[%s1] sm:$0xf]
    %v24 = vld [vmem:[%s1 + $0x4] sm:$0xf]
    %v25 = vld [vmem:[%s2] sm:$0x1]
    %v27 = vlaneseq
    %v28 = vshrl.u32 %v27, 7
    %v29 = vsub.s32 0, %v28
    %v30 = vrot.slane %v25, %v29
    %v34 = vunpack.c.l.b16 %v23
    %v35 = vunpack.c.l.b16 %v24
    %v36 = vpack.c.b16 %v35, %v34
    %vm38 = vcmask 130048
    %v40 = vsel %vm38, %v22, 0
    %42 = vmatprep.subr.bf16.mxu0 0
    %43 = vmatpush1.bf16.msra.mxu0 0
    %44 = vmatprep.subr.bf16.mxu0 0
    %45 = vmatpush1.bf16.msra.mxu0 0
    %46 = vmatprep.subr.bf16.mxu0 0
    %47 = vmatpush1.bf16.msra.mxu0 0
    %48 = vmatprep.subr.bf16.mxu0 0
    %49 = vmatpush1.bf16.msra.mxu0 0
    %50 = vmatprep.subr.bf16.mxu0 0
    %51 = vmatpush1.bf16.msra.mxu0 0
    %52 = vmatprep.subr.bf16.mxu0 0
    %53 = vmatpush1.bf16.msra.mxu0 0
    %54 = vmatprep.subr.bf16.mxu0 0
    %55 = vmatpush1.bf16.msra.mxu0 0
    %56 = vmatprep.subr.bf16.mxu0 0
    %57 = vmatpush1.bf16.msra.mxu0 %v36
    %58 = vmatprep.subr.bf16.mxu0 0
    %59 = vmatpush2.bf16.msra.mxu0 0
    %60 = vmatprep.subr.bf16.mxu0 0
    %61 = vmatpush2.bf16.msra.mxu0 0
    %62 = vmatprep.subr.bf16.mxu0 0
    %63 = vmatpush2.bf16.msra.mxu0 0
    %64 = vmatprep.subr.bf16.mxu0 0
    %65 = vmatpush2.bf16.msra.mxu0 0
    %66 = vmatprep.subr.bf16.mxu0 0
    %67 = vmatpush2.bf16.msra.mxu0 0
    %68 = vmatprep.subr.bf16.mxu0 0
    %69 = vmatpush2.bf16.msra.mxu0 0
    %70 = vmatprep.subr.bf16.mxu0 0
    %71 = vmatpush2.bf16.msra.mxu0 0
    %72 = vmatprep.subr.bf16.mxu0 0
    %73 = vmatpush2.bf16.msra.mxu0 0
    %74 = vmatprep.mubr.bf16.mxu0 0
    %75 = vmatmul.mubr.bf16.gmra.mxu0 %v40
    %v76 = vpop.f32.mrf.mxu0
    %v77 = vadd.f32 %v30, %v76
    %v78 = vpop.f32.mrf.mxu0
    %v79 = vpop.f32.mrf.mxu0
    %v80 = vpop.f32.mrf.mxu0
    %81 = vdwg.mxu0
    %v82 = vmax.f32 %v77, 0.0
    %v83 = vpack.c.bf16 %v82, %v82
    %v84 = vld [vmem:[%s3] sm:$0xf]
    %v85 = vld [vmem:[%s3 + $0x4] sm:$0xf]
    %v86 = vld [vmem:[%s3 + $0x8] sm:$0xf]
    %v87 = vld [vmem:[%s3 + $0xc] sm:$0xf]
    %v88 = vld [vmem:[%s4] sm:$0x1]
    %v90 = vlaneseq
    %v91 = vshrl.u32 %v90, 7
    %v92 = vsub.s32 0, %v91
    %v93 = vrot.slane %v88, %v92
    %v99 = vunpack.c.l.b16 %v84
    %v100 = vunpack.c.l.b16 %v85
    %v101 = vunpack.c.l.b16 %v86
    %v102 = vunpack.c.l.b16 %v87
    %v103 = vpack.c.b16 %v100, %v99
    %v104 = vpack.c.b16 %v102, %v101
    %vm107 = vcmask 261120
    %v109 = vsel %vm107, %v83, 0
    %111 = vmatprep.subr.bf16.mxu0 0
    %112 = vmatpush1.bf16.msra.mxu0 0
    %113 = vmatprep.subr.bf16.mxu0 0
    %114 = vmatpush1.bf16.msra.mxu0 0
    %115 = vmatprep.subr.bf16.mxu0 0
    %116 = vmatpush1.bf16.msra.mxu0 0
    %117 = vmatprep.subr.bf16.mxu0 0
    %118 = vmatpush1.bf16.msra.mxu0 0
    %119 = vmatprep.subr.bf16.mxu0 0
    %120 = vmatpush1.bf16.msra.mxu0 0
    %121 = vmatprep.subr.bf16.mxu0 0
    %122 = vmatpush1.bf16.msra.mxu0 0
    %123 = vmatprep.subr.bf16.mxu0 0
    %124 = vmatpush1.bf16.msra.mxu0 %v104
    %125 = vmatprep.subr.bf16.mxu0 0
    %126 = vmatpush1.bf16.msra.mxu0 %v103
    %127 = vmatprep.subr.bf16.mxu0 0
    %128 = vmatpush2.bf16.msra.mxu0 0
    %129 = vmatprep.subr.bf16.mxu0 0
    %130 = vmatpush2.bf16.msra.mxu0 0
    %131 = vmatprep.subr.bf16.mxu0 0
    %132 = vmatpush2.bf16.msra.mxu0 0
    %133 = vmatprep.subr.bf16.mxu0 0
    %134 = vmatpush2.bf16.msra.mxu0 0
    %135 = vmatprep.subr.bf16.mxu0 0
    %136 = vmatpush2.bf16.msra.mxu0 0
    %137 = vmatprep.subr.bf16.mxu0 0
    %138 = vmatpush2.bf16.msra.mxu0 0
    %139 = vmatprep.subr.bf16.mxu0 0
    %140 = vmatpush2.bf16.msra.mxu0 0
    %141 = vmatprep.subr.bf16.mxu0 0
    %142 = vmatpush2.bf16.msra.mxu0 0
    %143 = vmatprep.mubr.bf16.mxu0 0
    %144 = vmatmul.mubr.bf16.gmra.mxu0 %v109
    %v145 = vpop.f32.mrf.mxu0
    %v146 = vadd.f32 %v93, %v145
    %v147 = vpop.f32.mrf.mxu0
    %v148 = vpop.f32.mrf.mxu0
    %v149 = vpop.f32.mrf.mxu0
    %150 = vdwg.mxu0
    %vm151 = vcmask 64512
    %152 = vst.msk [vmem:[#allocation2] sm:$0xff] %vm151, %v146
    // Predicated region
    $region22: #{tpu_custom_call.1} parent=1 // pred_check
      _
    $region23: #{tpu_custom_call.1} parent=1 // pred_check_branch
      %154 = sbr.rel (0) target = $region25
    $region24: #{tpu_custom_call.1} parent=1 // pred_region
      %s156 = ssub.s32 128, 128
      %157 = vsyncadd [#allocation3], %s156
      %s159 = sshll.u32 [#allocation2], 4
      %s160 = int_to_ptr.vmem [resolvable:$true] %s159
      %162 = dma.vmem_to_hbm [thread:$0]  %s160, 128, %s5, [#allocation3]
    $region25: #{tpu_custom_call.1} parent=1 // pred_fallthru
      _
    // Predicated region
    $region26: #{tpu_custom_call.1} parent=1 // pred_check
      _
    $region27: #{tpu_custom_call.1} parent=1 // pred_check_branch
      %164 = sbr.rel (0) target = $region29
    $region28: #{tpu_custom_call.1} parent=1 // pred_region
      %165 = dma.done [#allocation3], 128
    $region29: #{tpu_custom_call.1} parent=1 // pred_fallthru
      _
    %166 = vsyncpa [#allocation3], 1

</llo_original>
